<compile_context>
chip_gen: v7x
topology: tpu7x:2x2x1
jax: 0.10.0
libtpu: 0.0.40
codegen_flags: <defaults>
</compile_context>

<pallas_src>
import jax
import jax.numpy as jnp
from jax.experimental import pallas as pl
from jax.experimental.pallas import tpu as pltpu


def _round_up(v: int, m: int) -> int:
    return ((v + m - 1) // m) * m


def _stable_softplus(x):
    # Matches torch.nn.functional.softplus semantics (linear branch above 20)
    # and avoids f32 exp overflow for large positive rho.
    return jnp.where(x > 20.0, x, jnp.log1p(jnp.exp(jnp.minimum(x, 20.0))))


def _bayes_linear_kernel(x_ref, mu_ref, rho_ref, eps_ref, o_ref, acc_ref):
    # grid = (M tiles, N tiles, K tiles); K (reduction) is the trailing axis.
    @pl.when(pl.program_id(2) == 0)
    def _():
        acc_ref[...] = jnp.zeros_like(acc_ref)

    # Reparameterized weight sample for this (N, K) tile, computed in f32.
    rho = rho_ref[...].astype(jnp.float32)
    std = _stable_softplus(rho)
    w = mu_ref[...].astype(jnp.float32) + std * eps_ref[...].astype(jnp.float32)

    # MXU matmul: contract last dim of x (tm, tk) with last dim of w (tn, tk).
    # bf16 MXU inputs, f32 accumulation; no transpose needed.
    acc_ref[...] += jax.lax.dot_general(
        x_ref[...].astype(jnp.bfloat16),
        w.astype(jnp.bfloat16),
        dimension_numbers=(((1,), (1,)), ((), ())),
        preferred_element_type=jnp.float32,
    )

    @pl.when(pl.program_id(2) == pl.num_programs(2) - 1)
    def _():
        o_ref[...] = acc_ref[...].astype(o_ref.dtype)


def bayesian_linear_alpha_forward(x, mu, rho, eps, *,
                                  tm=128, tn=256, tk=512,
                                  stream_dtype=jnp.bfloat16):
    """Pallas forward of BayesianLinearAlpha.

    x:   (B, in_features)
    mu:  (out_features, in_features)
    rho: (out_features, in_features)
    eps: (out_features, in_features)  -- standard-normal sample
    returns (B, out_features), dtype of x
    """
    B, in_f = x.shape
    out_f, in_f2 = mu.shape
    assert in_f == in_f2 and rho.shape == mu.shape and eps.shape == mu.shape

    # Clamp tile sizes to the (hardware-aligned) problem size.
    tm = min(tm, _round_up(B, 8))        # sublane-aligned batch tile
    tn = min(tn, _round_up(out_f, 128))  # lane-dense output tile
    tk = min(tk, _round_up(in_f, 128))   # lane-dense contraction tile

    Bp = _round_up(B, tm)
    Np = _round_up(out_f, tn)
    Kp = _round_up(in_f, tk)

    # Zero padding is exact: padded mu/eps are 0 so padded weights are exactly
    # 0 (regardless of softplus(rho_pad)); padded x columns are 0 as well.
    xp = jnp.pad(x, ((0, Bp - B), (0, Kp - in_f)))
    mup = jnp.pad(mu.astype(stream_dtype), ((0, Np - out_f), (0, Kp - in_f)))
    rhop = jnp.pad(rho.astype(stream_dtype), ((0, Np - out_f), (0, Kp - in_f)))
    epsp = jnp.pad(eps.astype(stream_dtype), ((0, Np - out_f), (0, Kp - in_f)))

    grid = (Bp // tm, Np // tn, Kp // tk)

    weight_bytes = out_f * in_f * jnp.dtype(stream_dtype).itemsize
    cost = pl.CostEstimate(
        flops=2 * B * out_f * in_f,
        transcendentals=2 * out_f * in_f,          # exp + log1p per weight elem
        bytes_accessed=(x.size * x.dtype.itemsize
                        + 3 * weight_bytes
                        + B * out_f * x.dtype.itemsize),
    )

    out = pl.pallas_call(
        _bayes_linear_kernel,
        out_shape=jax.ShapeDtypeStruct((Bp, Np), x.dtype),
        grid_spec=pltpu.PrefetchScalarGridSpec(
            num_scalar_prefetch=0,
            grid=grid,
            in_specs=[
                pl.BlockSpec((tm, tk), lambda i, j, k: (i, k)),   # x
                pl.BlockSpec((tn, tk), lambda i, j, k: (j, k)),   # mu
                pl.BlockSpec((tn, tk), lambda i, j, k: (j, k)),   # rho
                pl.BlockSpec((tn, tk), lambda i, j, k: (j, k)),   # eps
            ],
            out_specs=pl.BlockSpec((tm, tn), lambda i, j, k: (i, j)),
            scratch_shapes=[pltpu.VMEM((tm, tn), jnp.float32)],
        ),
        compiler_params=pltpu.CompilerParams(
            dimension_semantics=("parallel", "parallel", "arbitrary"),
            vmem_limit_bytes=32 * 1024 * 1024,   # fits v5e/v6e/v7x scoped VMEM
        ),
        cost_estimate=cost,
    )(xp, mup, rhop, epsp)

    return out[:B, :out_f]


def alpha_divergence_ref(q_mu, q_sigma, alpha=0.5):
    # Plain-JAX helper matching the PyTorch alpha_divergence (not a hot path).
    return 1.0 / (alpha * (1.0 - alpha)) * (
        1.0 - jnp.sum(jnp.exp(-alpha * (q_mu ** 2 + q_sigma ** 2) / 2.0))
    )


if __name__ == "__main__":
    key = jax.random.PRNGKey(0)
    k_x, k_mu, k_rho, k_eps = jax.random.split(key, 4)

    batch = 4
    in_features = 32
    out_features = 16

    x = jax.random.normal(k_x, (batch, in_features), dtype=jnp.float32)
    mu = 0.1 * jax.random.normal(k_mu, (out_features, in_features), dtype=jnp.float32)
    rho = -3.0 * jax.random.normal(k_rho, (out_features, in_features), dtype=jnp.float32)
    # torch.randn_like(std) is sampled here (deterministic) and passed in.
    eps = jax.random.normal(k_eps, (out_features, in_features), dtype=jnp.float32)

    y = jax.block_until_ready(bayesian_linear_alpha_forward(x, mu, rho, eps))
    assert y.shape == (batch, out_features)

    # Reference 1: identical reduced-precision pipeline in plain JAX (tight).
    mu_b = mu.astype(jnp.bfloat16).astype(jnp.float32)
    rho_b = rho.astype(jnp.bfloat16).astype(jnp.float32)
    eps_b = eps.astype(jnp.bfloat16).astype(jnp.float32)
    std_b = _stable_softplus(rho_b)
    w_b = (mu_b + std_b * eps_b).astype(jnp.bfloat16)
    y_ref_bf16 = jax.lax.dot_general(
        x.astype(jnp.bfloat16), w_b,
        dimension_numbers=(((1,), (1,)), ((), ())),
        preferred_element_type=jnp.float32,
    ).astype(x.dtype)
    assert jnp.allclose(y, y_ref_bf16, atol=1e-2, rtol=1e-2), "mismatch vs bf16 reference"

    # Reference 2: full-f32 module semantics (loose, covers bf16 streaming error).
    std_f32 = jnp.log1p(jnp.exp(rho))
    w_f32 = mu + std_f32 * eps
    y_ref_f32 = x @ w_f32.T
    assert jnp.allclose(y, y_ref_f32, atol=0.5, rtol=5e-2), "mismatch vs f32 reference"

    # alpha_div sanity (glue-level; uses the same softplus std).
    _ = jax.block_until_ready(alpha_divergence_ref(mu, std_f32, alpha=0.5))

    print("KERNEL_OK")
</pallas_src>

<mosaic_0001>
module attributes {stable_mosaic.version = 11 : i64} {
  func.func @_bayes_linear_kernel(%arg0: i32, %arg1: i32, %arg2: i32, %arg3: memref<8x128xf32, #tpu.memory_space<vmem>>, %arg4: memref<128x128xbf16, #tpu.memory_space<vmem>>, %arg5: memref<128x128xbf16, #tpu.memory_space<vmem>>, %arg6: memref<128x128xbf16, #tpu.memory_space<vmem>>, %arg7: memref<8x128xf32, #tpu.memory_space<vmem>>, %arg8: memref<8x128xf32, #tpu.memory_space<vmem>>) attributes {dimension_semantics = [#tpu.dimension_semantics<parallel>, #tpu.dimension_semantics<parallel>, #tpu.dimension_semantics<arbitrary>], iteration_bounds = array<i64: 1, 1, 1>, scalar_prefetch = 0 : i64, scratch_operands = 1 : i64, tpu.core_type = #tpu.core_type<tc>, window_params = [{transform_indices = @transform_0, window_bounds = array<i64: 8, 128>}, {transform_indices = @transform_1, window_bounds = array<i64: 128, 128>}, {transform_indices = @transform_2, window_bounds = array<i64: 128, 128>}, {transform_indices = @transform_3, window_bounds = array<i64: 128, 128>}, {transform_indices = @transform_4, window_bounds = array<i64: 8, 128>}]} {
    %c0_i32 = arith.constant 0 : i32
    %0 = arith.cmpi eq, %arg2, %c0_i32 : i32
    %1 = arith.extui %0 : i1 to i32
    %c0_i32_0 = arith.constant 0 : i32
    %2 = arith.cmpi ne, %1, %c0_i32_0 : i32
    scf.if %2 {
      %cst_16 = arith.constant 0.000000e+00 : f32
      %28 = vector.broadcast %cst_16 : f32 to vector<8x128xf32>
      %c0_17 = arith.constant 0 : index
      %c0_18 = arith.constant 0 : index
      %29 = vector.load %arg8[%c0_17, %c0_18] : memref<8x128xf32, #tpu.memory_space<vmem>>, vector<8x128xf32>
      tpu.vector_store %arg8[%c0_17, %c0_18], %28 {strides = array<i32>} : memref<8x128xf32, #tpu.memory_space<vmem>>, vector<8x128xf32>,
    } else {
    }
    %c0 = arith.constant 0 : index
    %c0_1 = arith.constant 0 : index
    %3 = vector.load %arg5[%c0, %c0_1] : memref<128x128xbf16, #tpu.memory_space<vmem>>, vector<128x128xbf16>
    %4 = arith.extf %3 : vector<128x128xbf16> to vector<128x128xf32>
    %cst = arith.constant 2.000000e+01 : f32
    %5 = vector.broadcast %cst : f32 to vector<128x128xf32>
    %6 = arith.cmpf ogt, %4, %5 : vector<128x128xf32>
    %cst_2 = arith.constant 2.000000e+01 : f32
    %7 = vector.broadcast %cst_2 : f32 to vector<128x128xf32>
    %8 = arith.minimumf %4, %7 : vector<128x128xf32>
    %9 = math.exp %8 : vector<128x128xf32>
    %10 = math.log1p %9 : vector<128x128xf32>
    %11 = arith.select %6, %4, %10 : vector<128x128xi1>, vector<128x128xf32>
    %c0_3 = arith.constant 0 : index
    %c0_4 = arith.constant 0 : index
    %12 = vector.load %arg4[%c0_3, %c0_4] : memref<128x128xbf16, #tpu.memory_space<vmem>>, vector<128x128xbf16>
    %13 = arith.extf %12 : vector<128x128xbf16> to vector<128x128xf32>
    %c0_5 = arith.constant 0 : index
    %c0_6 = arith.constant 0 : index
    %14 = vector.load %arg6[%c0_5, %c0_6] : memref<128x128xbf16, #tpu.memory_space<vmem>>, vector<128x128xbf16>
    %15 = arith.extf %14 : vector<128x128xbf16> to vector<128x128xf32>
    %16 = arith.mulf %11, %15 : vector<128x128xf32>
    %17 = arith.addf %13, %16 : vector<128x128xf32>
    %c0_7 = arith.constant 0 : index
    %c0_8 = arith.constant 0 : index
    %18 = vector.load %arg8[%c0_7, %c0_8] : memref<8x128xf32, #tpu.memory_space<vmem>>, vector<8x128xf32>
    %c0_9 = arith.constant 0 : index
    %c0_10 = arith.constant 0 : index
    %19 = vector.load %arg3[%c0_9, %c0_10] : memref<8x128xf32, #tpu.memory_space<vmem>>, vector<8x128xf32>
    %20 = arith.truncf %19 : vector<8x128xf32> to vector<8x128xbf16>
    %21 = arith.truncf %17 : vector<128x128xf32> to vector<128x128xbf16>
    %cst_11 = arith.constant dense<0.000000e+00> : vector<8x128xf32>
    %22 = tpu.matmul %20, %21, %cst_11 {dimension_numbers = #tpu.dot_dimension_numbers<[1], [1], [0], [0], [0, 0, 1, 0], [], []>} : vector<8x128xbf16>, vector<128x128xbf16>, vector<8x128xf32> -> vector<8x128xf32>
    %23 = arith.addf %18, %22 : vector<8x128xf32>
    %c0_12 = arith.constant 0 : index
    %c0_13 = arith.constant 0 : index
    %24 = vector.load %arg8[%c0_12, %c0_13] : memref<8x128xf32, #tpu.memory_space<vmem>>, vector<8x128xf32>
    tpu.vector_store %arg8[%c0_12, %c0_13], %23 {strides = array<i32>} : memref<8x128xf32, #tpu.memory_space<vmem>>, vector<8x128xf32>,
    %c0_i32_14 = arith.constant 0 : i32
    %25 = arith.cmpi eq, %arg2, %c0_i32_14 : i32
    %26 = arith.extui %25 : i1 to i32
    %c0_i32_15 = arith.constant 0 : i32
    %27 = arith.cmpi ne, %26, %c0_i32_15 : i32
    scf.if %27 {
      %c0_16 = arith.constant 0 : index
      %c0_17 = arith.constant 0 : index
      %28 = vector.load %arg8[%c0_16, %c0_17] : memref<8x128xf32, #tpu.memory_space<vmem>>, vector<8x128xf32>
      %c0_18 = arith.constant 0 : index
      %c0_19 = arith.constant 0 : index
      %29 = vector.load %arg7[%c0_18, %c0_19] : memref<8x128xf32, #tpu.memory_space<vmem>>, vector<8x128xf32>
      tpu.vector_store %arg7[%c0_18, %c0_19], %28 {strides = array<i32>} : memref<8x128xf32, #tpu.memory_space<vmem>>, vector<8x128xf32>,
    } else {
    }
    return
  }
  func.func @transform_0(%arg0: i32, %arg1: i32, %arg2: i32) -> (i32, i32) {
    %c0_i32 = arith.constant 0 : i32
    return %arg0, %arg2 : i32, i32
  }
  func.func @transform_1(%arg0: i32, %arg1: i32, %arg2: i32) -> (i32, i32) {
    %c0_i32 = arith.constant 0 : i32
    return %arg1, %arg2 : i32, i32
  }
  func.func @transform_2(%arg0: i32, %arg1: i32, %arg2: i32) -> (i32, i32) {
    %c0_i32 = arith.constant 0 : i32
    return %arg1, %arg2 : i32, i32
  }
  func.func @transform_3(%arg0: i32, %arg1: i32, %arg2: i32) -> (i32, i32) {
    %c0_i32 = arith.constant 0 : i32
    return %arg1, %arg2 : i32, i32
  }
  func.func @transform_4(%arg0: i32, %arg1: i32, %arg2: i32) -> (i32, i32) {
    %c0_i32 = arith.constant 0 : i32
    return %arg0, %arg1 : i32, i32
  }
}

</mosaic_0001>

<llo_original>
// kernel: tpu_custom_call.1
$region0: #{tpu_custom_call.1}
  #allocation0 [shape = 'u32[]', space=smem, size = 0x4, offset = 0x4, fixed_abs, tag = 'smem constant byte address 0x4 - core index']
  #allocation1 [shape = 'u32[144,128]{1,0:T(1,128)}', space=vmem, size = 0x12000, scoped, tag = 'internal scratch']
  #allocation2 [shape = 'f32[8,128]{1,0:T(8,128)}', space=vmem, size = 0x1000, scoped, tag = 'scratch operand']
  %s0 = inlined_call_operand.hbm [shape: f32[8,128], index: 0, kind: input, shape index: {}]
  %s1 = inlined_call_operand.hbm [shape: bf16[128,128], index: 1, kind: input, shape index: {}]
  %s2 = inlined_call_operand.hbm [shape: bf16[128,128], index: 2, kind: input, shape index: {}]
  %s3 = inlined_call_operand.hbm [shape: bf16[128,128], index: 3, kind: input, shape index: {}]
  %s4 = inlined_call_operand.hbm [shape: f32[8,128], index: 4, kind: output, shape index: {}]
  %s5 = sld [smem:[#allocation0]]
  $region50: #{tpu_custom_call.1} parent=0
    _
  %s7 = ssub.s32 1, %s5
  %s8 = scalar_select 0, %s7, %s5
  $region1: #{tpu_custom_call.1} parent=0
    #allocation3 [shape = 'u8[4096]{0}', space=vmem, size = 0x1000, scoped, tag = 'input window, operand 0, single buffered']
    #allocation4 [shape = 's32[1]{0}', space=sflag, size = 0x4, scoped, tag = 'scoped memory for tpu_custom_call.1']
    #allocation5 [shape = 's32[1]{0}', space=sflag, size = 0x4, scoped, tag = 'scoped memory for tpu_custom_call.1']
    #allocation6 [shape = 'u8[32768]{0}', space=vmem, size = 0x8000, scoped, tag = 'input window, operand 1, single buffered']
    #allocation7 [shape = 's32[1]{0}', space=sflag, size = 0x4, scoped, tag = 'scoped memory for tpu_custom_call.1']
    #allocation8 [shape = 'u8[32768]{0}', space=vmem, size = 0x8000, scoped, tag = 'input window, operand 2, single buffered']
    #allocation9 [shape = 'u8[32768]{0}', space=vmem, size = 0x8000, scoped, tag = 'input window, operand 3, single buffered']
    #allocation10 [shape = 's32[1]{0}', space=sflag, size = 0x4, scoped, tag = 'scoped memory for tpu_custom_call.1']
    #allocation11 [shape = 'u8[4096]{0}', space=vmem, size = 0x1000, scoped, tag = 'output window, operand 0, single buffered']
    %9 = vsyncpa [#allocation4], 0
    %10 = vsyncpa [#allocation7], 0
    %11 = vsyncpa [#allocation10], 0
    %12 = vsyncpa [#allocation5], 0
    // Predicated region
    $region2: #{tpu_custom_call.1} parent=1 // pred_check
      _
    $region3: #{tpu_custom_call.1} parent=1 // pred_check_branch
      %14 = sbr.rel (0) target = $region5
    $region4: #{tpu_custom_call.1} parent=1 // pred_region
      %s16 = ssub.s32 128, 128
      %17 = vsyncadd [#allocation4], %s16
      %s19 = sshll.u32 [#allocation3], 4
      %s20 = int_to_ptr.vmem [resolvable:$true] %s19
      %22 = dma.hbm_to_vmem [thread:$0]  %s0, 128, %s20, [#allocation4]
    $region5: #{tpu_custom_call.1} parent=1 // pred_fallthru
      _
    // Predicated region
    $region6: #{tpu_custom_call.1} parent=1 // pred_check
      _
    $region7: #{tpu_custom_call.1} parent=1 // pred_check_branch
      %24 = sbr.rel (0) target = $region9
    $region8: #{tpu_custom_call.1} parent=1 // pred_region
      %s26 = ssub.s32 1024, 1024
      %27 = vsyncadd [#allocation7], %s26
      %s28 = sshll.u32 [#allocation6], 4
      %s29 = int_to_ptr.vmem [resolvable:$true] %s28
      %34 = dma.hbm_to_vmem [thread:$0]  %s1, 1024, %s29, [#allocation7], 64, 64, 4
    $region9: #{tpu_custom_call.1} parent=1 // pred_fallthru
      _
    // Predicated region
    $region10: #{tpu_custom_call.1} parent=1 // pred_check
      _
    $region11: #{tpu_custom_call.1} parent=1 // pred_check_branch
      %36 = sbr.rel (0) target = $region13
    $region12: #{tpu_custom_call.1} parent=1 // pred_region
      %s38 = ssub.s32 1024, 1024
      %39 = vsyncadd [#allocation7], %s38
      %s40 = sshll.u32 [#allocation8], 4
      %s41 = int_to_ptr.vmem [resolvable:$true] %s40
      %46 = dma.hbm_to_vmem [thread:$0]  %s2, 1024, %s41, [#allocation7], 64, 64, 4
    $region13: #{tpu_custom_call.1} parent=1 // pred_fallthru
      _
    // Predicated region
    $region14: #{tpu_custom_call.1} parent=1 // pred_check
      _
    $region15: #{tpu_custom_call.1} parent=1 // pred_check_branch
      %48 = sbr.rel (0) target = $region17
    $region16: #{tpu_custom_call.1} parent=1 // pred_region
      %s50 = ssub.s32 1024, 1024
      %51 = vsyncadd [#allocation10], %s50
      %s52 = sshll.u32 [#allocation9], 4
      %s53 = int_to_ptr.vmem [resolvable:$true] %s52
      %58 = dma.hbm_to_vmem [thread:$0]  %s3, 1024, %s53, [#allocation10], 64, 64, 4
    $region17: #{tpu_custom_call.1} parent=1 // pred_fallthru
      _
    // Predicated region
    $region18: #{tpu_custom_call.1} parent=1 // pred_check
      _
    $region19: #{tpu_custom_call.1} parent=1 // pred_check_branch
      %60 = sbr.rel (0) target = $region21
    $region20: #{tpu_custom_call.1} parent=1 // pred_region
      %61 = dma.done [#allocation4], 128
    $region21: #{tpu_custom_call.1} parent=1 // pred_fallthru
      _
    // Predicated region
    $region22: #{tpu_custom_call.1} parent=1 // pred_check
      _
    $region23: #{tpu_custom_call.1} parent=1 // pred_check_branch
      %63 = sbr.rel (0) target = $region25
    $region24: #{tpu_custom_call.1} parent=1 // pred_region
      %64 = dma.done [#allocation7], 1024
    $region25: #{tpu_custom_call.1} parent=1 // pred_fallthru
      _
    // Predicated region
    $region26: #{tpu_custom_call.1} parent=1 // pred_check
      _
    $region27: #{tpu_custom_call.1} parent=1 // pred_check_branch
      %66 = sbr.rel (0) target = $region29
    $region28: #{tpu_custom_call.1} parent=1 // pred_region
      %67 = dma.done [#allocation7], 1024
    $region29: #{tpu_custom_call.1} parent=1 // pred_fallthru
      _
    // Predicated region
    $region30: #{tpu_custom_call.1} parent=1 // pred_check
      _
    $region31: #{tpu_custom_call.1} parent=1 // pred_check_branch
      %69 = sbr.rel (0) target = $region33
    $region32: #{tpu_custom_call.1} parent=1 // pred_region
      %70 = dma.done [#allocation10], 1024
    $region33: #{tpu_custom_call.1} parent=1 // pred_fallthru
      _
    %p72 = scmp.eq.s32.totalorder 0, 0
    // Predicated region
    $region34: #{tpu_custom_call.1} parent=1 // pred_check
      %p73 = pneg %p72
    $region35: #{tpu_custom_call.1} parent=1 // pred_check_branch
      %75 = sbr.rel (%p73) target = $region37
    $region36: #{tpu_custom_call.1} parent=1 // pred_region
      %76 = vst [vmem:[#allocation2] sm:$0xff] 0.0
    $region37: #{tpu_custom_call.1} parent=1 // pred_fallthru
      _
    %v77 = vld [vmem:[#allocation8] sm:$0xf]
    %v78 = vld [vmem:[#allocation8 + $0x4] sm:$0xf]
    %v79 = vld [vmem:[#allocation8 + $0x8] sm:$0xf]
    %v80 = vld [vmem:[#allocation8 + $0xc] sm:$0xf]
    %v81 = vld [vmem:[#allocation8 + $0x10] sm:$0xf]
    %v82 = vld [vmem:[#allocation8 + $0x14] sm:$0xf]
    %v83 = vld [vmem:[#allocation8 + $0x18] sm:$0xf]
    %v84 = vld [vmem:[#allocation8 + $0x1c] sm:$0xf]
    %v85 = vld [vmem:[#allocation8 + $0x20] sm:$0xf]
    %v86 = vld [vmem:[#allocation8 + $0x24] sm:$0xf]
    %v87 = vld [vmem:[#allocation8 + $0x28] sm:$0xf]
    %v88 = vld [vmem:[#allocation8 + $0x2c] sm:$0xf]
    %v89 = vld [vmem:[#allocation8 + $0x30] sm:$0xf]
    %v90 = vld [vmem:[#allocation8 + $0x34] sm:$0xf]
    %v91 = vld [vmem:[#allocation8 + $0x38] sm:$0xf]
    %v92 = vld [vmem:[#allocation8 + $0x3c] sm:$0xf]
    %v93 = vunpack.c.l.bf16 %v77
    %v94 = vunpack.c.l.bf16 %v78
    %v95 = vunpack.c.l.bf16 %v79
    %v96 = vunpack.c.l.bf16 %v80
    %v97 = vunpack.c.l.bf16 %v81
    %v98 = vunpack.c.l.bf16 %v82
    %v99 = vunpack.c.l.bf16 %v83
    %v100 = vunpack.c.l.bf16 %v84
    %v101 = vunpack.c.l.bf16 %v85
    %v102 = vunpack.c.l.bf16 %v86
    %v103 = vunpack.c.l.bf16 %v87
    %v104 = vunpack.c.l.bf16 %v88
    %v105 = vunpack.c.l.bf16 %v89
    %v106 = vunpack.c.l.bf16 %v90
    %v107 = vunpack.c.l.bf16 %v91
    %v108 = vunpack.c.l.bf16 %v92
    %vm109 = vcmp.gt.f32.partialorder %v93, 20.0
    %vm110 = vcmp.gt.f32.partialorder %v94, 20.0
    %vm111 = vcmp.gt.f32.partialorder %v95, 20.0
    %vm112 = vcmp.gt.f32.partialorder %v96, 20.0
    %vm113 = vcmp.gt.f32.partialorder %v97, 20.0
    %vm114 = vcmp.gt.f32.partialorder %v98, 20.0
    %vm115 = vcmp.gt.f32.partialorder %v99, 20.0
    %vm116 = vcmp.gt.f32.partialorder %v100, 20.0
    %vm117 = vcmp.gt.f32.partialorder %v101, 20.0
    %vm118 = vcmp.gt.f32.partialorder %v102, 20.0
    %vm119 = vcmp.gt.f32.partialorder %v103, 20.0
    %vm120 = vcmp.gt.f32.partialorder %v104, 20.0
    %vm121 = vcmp.gt.f32.partialorder %v105, 20.0
    %vm122 = vcmp.gt.f32.partialorder %v106, 20.0
    %vm123 = vcmp.gt.f32.partialorder %v107, 20.0
    %vm124 = vcmp.gt.f32.partialorder %v108, 20.0
    %v125 = vmin.f32 %v93, 20.0
    %v126 = vmin.f32 %v94, 20.0
    %v127 = vmin.f32 %v95, 20.0
    %v128 = vmin.f32 %v96, 20.0
    %v129 = vmin.f32 %v97, 20.0
    %v130 = vmin.f32 %v98, 20.0
    %v131 = vmin.f32 %v99, 20.0
    %v132 = vmin.f32 %v100, 20.0
    %v133 = vmin.f32 %v101, 20.0
    %v134 = vmin.f32 %v102, 20.0
    %v135 = vmin.f32 %v103, 20.0
    %v136 = vmin.f32 %v104, 20.0
    %v137 = vmin.f32 %v105, 20.0
    %v138 = vmin.f32 %v106, 20.0
    %v139 = vmin.f32 %v107, 20.0
    %v140 = vmin.f32 %v108, 20.0
    %v141 = vmul.f32 %v125, 1.442695
    %v142 = vpow.pop %v141
    %v143 = vmul.f32 %v126, 1.442695
    %v144 = vpow.pop %v143
    %v145 = vmul.f32 %v127, 1.442695
    %v146 = vpow.pop %v145
    %v147 = vmul.f32 %v128, 1.442695
    %v148 = vpow.pop %v147
    %v149 = vmul.f32 %v129, 1.442695
    %v150 = vpow.pop %v149
    %v151 = vmul.f32 %v130, 1.442695
    %v152 = vpow.pop %v151
    %v153 = vmul.f32 %v131, 1.442695
    %v154 = vpow.pop %v153
    %v155 = vmul.f32 %v132, 1.442695
    %v156 = vpow.pop %v155
    %v157 = vmul.f32 %v133, 1.442695
    %v158 = vpow.pop %v157
    %v159 = vmul.f32 %v134, 1.442695
    %v160 = vpow.pop %v159
    %v161 = vmul.f32 %v135, 1.442695
    %v162 = vpow.pop %v161
    %v163 = vmul.f32 %v136, 1.442695
    %v164 = vpow.pop %v163
    %v165 = vmul.f32 %v137, 1.442695
    %v166 = vpow.pop %v165
    %v167 = vmul.f32 %v138, 1.442695
    %v168 = vpow.pop %v167
    %v169 = vmul.f32 %v139, 1.442695
    %v170 = vpow.pop %v169
    %v171 = vmul.f32 %v140, 1.442695
    %v172 = vpow.pop %v171
    %v173 = vadd.f32 %v142, 1.0
    %v174 = vlog2.pop %v173
    %v175 = vmul.f32 %v174, 0.6931472
    %v176 = vmul.f32 -0.5, %v142
    %v177 = vadd.f32 %v176, 1.0
    %v178 = vmul.f32 %v177, %v142
    %v179 = vand.u32 2147483647, %v142
    %vm180 = vcmp.lt.f32.partialorder %v179, 0.0004427343
    %v181 = vsel %vm180, %v178, %v175
    %v182 = vadd.f32 %v144, 1.0
    %v183 = vlog2.pop %v182
    %v184 = vmul.f32 %v183, 0.6931472
    %v185 = vmul.f32 -0.5, %v144
    %v186 = vadd.f32 %v185, 1.0
    %v187 = vmul.f32 %v186, %v144
    %v188 = vand.u32 2147483647, %v144
    %vm189 = vcmp.lt.f32.partialorder %v188, 0.0004427343
    %v190 = vsel %vm189, %v187, %v184
    %v191 = vadd.f32 %v146, 1.0
    %v192 = vlog2.pop %v191
    %v193 = vmul.f32 %v192, 0.6931472
    %v194 = vmul.f32 -0.5, %v146
    %v195 = vadd.f32 %v194, 1.0
    %v196 = vmul.f32 %v195, %v146
    %v197 = vand.u32 2147483647, %v146
    %vm198 = vcmp.lt.f32.partialorder %v197, 0.0004427343
    %v199 = vsel %vm198, %v196, %v193
    %v200 = vadd.f32 %v148, 1.0
    %v201 = vlog2.pop %v200
    %v202 = vmul.f32 %v201, 0.6931472
    %v203 = vmul.f32 -0.5, %v148
    %v204 = vadd.f32 %v203, 1.0
    %v205 = vmul.f32 %v204, %v148
    %v206 = vand.u32 2147483647, %v148
    %vm207 = vcmp.lt.f32.partialorder %v206, 0.0004427343
    %v208 = vsel %vm207, %v205, %v202
    %v209 = vadd.f32 %v150, 1.0
    %v210 = vlog2.pop %v209
    %v211 = vmul.f32 %v210, 0.6931472
    %v212 = vmul.f32 -0.5, %v150
    %v213 = vadd.f32 %v212, 1.0
    %v214 = vmul.f32 %v213, %v150
    %v215 = vand.u32 2147483647, %v150
    %vm216 = vcmp.lt.f32.partialorder %v215, 0.0004427343
    %v217 = vsel %vm216, %v214, %v211
    %v218 = vadd.f32 %v152, 1.0
    %v219 = vlog2.pop %v218
    %v220 = vmul.f32 %v219, 0.6931472
    %v221 = vmul.f32 -0.5, %v152
    %v222 = vadd.f32 %v221, 1.0
    %v223 = vmul.f32 %v222, %v152
    %v224 = vand.u32 2147483647, %v152
    %vm225 = vcmp.lt.f32.partialorder %v224, 0.0004427343
    %v226 = vsel %vm225, %v223, %v220
    %v227 = vadd.f32 %v154, 1.0
    %v228 = vlog2.pop %v227
    %v229 = vmul.f32 %v228, 0.6931472
    %v230 = vmul.f32 -0.5, %v154
    %v231 = vadd.f32 %v230, 1.0
    %v232 = vmul.f32 %v231, %v154
    %v233 = vand.u32 2147483647, %v154
    %vm234 = vcmp.lt.f32.partialorder %v233, 0.0004427343
    %v235 = vsel %vm234, %v232, %v229
    %v236 = vadd.f32 %v156, 1.0
    %v237 = vlog2.pop %v236
    %v238 = vmul.f32 %v237, 0.6931472
    %v239 = vmul.f32 -0.5, %v156
    %v240 = vadd.f32 %v239, 1.0
    %v241 = vmul.f32 %v240, %v156
    %v242 = vand.u32 2147483647, %v156
    %vm243 = vcmp.lt.f32.partialorder %v242, 0.0004427343
    %v244 = vsel %vm243, %v241, %v238
    %v245 = vadd.f32 %v158, 1.0
    %v246 = vlog2.pop %v245
    %v247 = vmul.f32 %v246, 0.6931472
    %v248 = vmul.f32 -0.5, %v158
    %v249 = vadd.f32 %v248, 1.0
    %v250 = vmul.f32 %v249, %v158
    %v251 = vand.u32 2147483647, %v158
    %vm252 = vcmp.lt.f32.partialorder %v251, 0.0004427343
    %v253 = vsel %vm252, %v250, %v247
    %v254 = vadd.f32 %v160, 1.0
    %v255 = vlog2.pop %v254
    %v256 = vmul.f32 %v255, 0.6931472
    %v257 = vmul.f32 -0.5, %v160
    %v258 = vadd.f32 %v257, 1.0
    %v259 = vmul.f32 %v258, %v160
    %v260 = vand.u32 2147483647, %v160
    %vm261 = vcmp.lt.f32.partialorder %v260, 0.0004427343
    %v262 = vsel %vm261, %v259, %v256
    %v263 = vadd.f32 %v162, 1.0
    %v264 = vlog2.pop %v263
    %v265 = vmul.f32 %v264, 0.6931472
    %v266 = vmul.f32 -0.5, %v162
    %v267 = vadd.f32 %v266, 1.0
    %v268 = vmul.f32 %v267, %v162
    %v269 = vand.u32 2147483647, %v162
    %vm270 = vcmp.lt.f32.partialorder %v269, 0.0004427343
    %v271 = vsel %vm270, %v268, %v265
    %v272 = vadd.f32 %v164, 1.0
    %v273 = vlog2.pop %v272
    %v274 = vmul.f32 %v273, 0.6931472
    %v275 = vmul.f32 -0.5, %v164
    %v276 = vadd.f32 %v275, 1.0
    %v277 = vmul.f32 %v276, %v164
    %v278 = vand.u32 2147483647, %v164
    %vm279 = vcmp.lt.f32.partialorder %v278, 0.0004427343
    %v280 = vsel %vm279, %v277, %v274
    %v281 = vadd.f32 %v166, 1.0
    %v282 = vlog2.pop %v281
    %v283 = vmul.f32 %v282, 0.6931472
    %v284 = vmul.f32 -0.5, %v166
    %v285 = vadd.f32 %v284, 1.0
    %v286 = vmul.f32 %v285, %v166
    %v287 = vand.u32 2147483647, %v166
    %vm288 = vcmp.lt.f32.partialorder %v287, 0.0004427343
    %v289 = vsel %vm288, %v286, %v283
    %v290 = vadd.f32 %v168, 1.0
    %v291 = vlog2.pop %v290
    %v292 = vmul.f32 %v291, 0.6931472
    %v293 = vmul.f32 -0.5, %v168
    %v294 = vadd.f32 %v293, 1.0
    %v295 = vmul.f32 %v294, %v168
    %v296 = vand.u32 2147483647, %v168
    %vm297 = vcmp.lt.f32.partialorder %v296, 0.0004427343
    %v298 = vsel %vm297, %v295, %v292
    %v299 = vadd.f32 %v170, 1.0
    %v300 = vlog2.pop %v299
    %v301 = vmul.f32 %v300, 0.6931472
    %v302 = vmul.f32 -0.5, %v170
    %v303 = vadd.f32 %v302, 1.0
    %v304 = vmul.f32 %v303, %v170
    %v305 = vand.u32 2147483647, %v170
    %vm306 = vcmp.lt.f32.partialorder %v305, 0.0004427343
    %v307 = vsel %vm306, %v304, %v301
    %v308 = vadd.f32 %v172, 1.0
    %v309 = vlog2.pop %v308
    %v310 = vmul.f32 %v309, 0.6931472
    %v311 = vmul.f32 -0.5, %v172
    %v312 = vadd.f32 %v311, 1.0
    %v313 = vmul.f32 %v312, %v172
    %v314 = vand.u32 2147483647, %v172
    %vm315 = vcmp.lt.f32.partialorder %v314, 0.0004427343
    %v316 = vsel %vm315, %v313, %v310
    %v317 = vsel %vm109, %v93, %v181
    %v318 = vsel %vm110, %v94, %v190
    %v319 = vsel %vm111, %v95, %v199
    %v320 = vsel %vm112, %v96, %v208
    %v321 = vsel %vm113, %v97, %v217
    %v322 = vsel %vm114, %v98, %v226
    %v323 = vsel %vm115, %v99, %v235
    %v324 = vsel %vm116, %v100, %v244
    %v325 = vsel %vm117, %v101, %v253
    %v326 = vsel %vm118, %v102, %v262
    %v327 = vsel %vm119, %v103, %v271
    %v328 = vsel %vm120, %v104, %v280
    %v329 = vsel %vm121, %v105, %v289
    %v330 = vsel %vm122, %v106, %v298
    %v331 = vsel %vm123, %v107, %v307
    %v332 = vsel %vm124, %v108, %v316
    %v333 = vld [vmem:[#allocation6] sm:$0xf]
    %v334 = vld [vmem:[#allocation6 + $0x4] sm:$0xf]
    %v335 = vld [vmem:[#allocation6 + $0x8] sm:$0xf]
    %v336 = vld [vmem:[#allocation6 + $0xc] sm:$0xf]
    %v337 = vld [vmem:[#allocation6 + $0x10] sm:$0xf]
    %v338 = vld [vmem:[#allocation6 + $0x14] sm:$0xf]
    %v339 = vld [vmem:[#allocation6 + $0x18] sm:$0xf]
    %v340 = vld [vmem:[#allocation6 + $0x1c] sm:$0xf]
    %v341 = vld [vmem:[#allocation6 + $0x20] sm:$0xf]
    %v342 = vld [vmem:[#allocation6 + $0x24] sm:$0xf]
    %v343 = vld [vmem:[#allocation6 + $0x28] sm:$0xf]
    %v344 = vld [vmem:[#allocation6 + $0x2c] sm:$0xf]
    %v345 = vld [vmem:[#allocation6 + $0x30] sm:$0xf]
    %v346 = vld [vmem:[#allocation6 + $0x34] sm:$0xf]
    %v347 = vld [vmem:[#allocation6 + $0x38] sm:$0xf]
    %v348 = vld [vmem:[#allocation6 + $0x3c] sm:$0xf]
    %v349 = vunpack.c.l.bf16 %v333
    %v350 = vunpack.c.l.bf16 %v334
    %v351 = vunpack.c.l.bf16 %v335
    %v352 = vunpack.c.l.bf16 %v336
    %v353 = vunpack.c.l.bf16 %v337
    %v354 = vunpack.c.l.bf16 %v338
    %v355 = vunpack.c.l.bf16 %v339
    %v356 = vunpack.c.l.bf16 %v340
    %v357 = vunpack.c.l.bf16 %v341
    %v358 = vunpack.c.l.bf16 %v342
    %v359 = vunpack.c.l.bf16 %v343
    %v360 = vunpack.c.l.bf16 %v344
    %v361 = vunpack.c.l.bf16 %v345
    %v362 = vunpack.c.l.bf16 %v346
    %v363 = vunpack.c.l.bf16 %v347
    %v364 = vunpack.c.l.bf16 %v348
    %v365 = vld [vmem:[#allocation9] sm:$0xf]
    %v366 = vld [vmem:[#allocation9 + $0x4] sm:$0xf]
    %v367 = vld [vmem:[#allocation9 + $0x8] sm:$0xf]
    %v368 = vld [vmem:[#allocation9 + $0xc] sm:$0xf]
    %v369 = vld [vmem:[#allocation9 + $0x10] sm:$0xf]
    %v370 = vld [vmem:[#allocation9 + $0x14] sm:$0xf]
    %v371 = vld [vmem:[#allocation9 + $0x18] sm:$0xf]
    %v372 = vld [vmem:[#allocation9 + $0x1c] sm:$0xf]
    %v373 = vld [vmem:[#allocation9 + $0x20] sm:$0xf]
    %v374 = vld [vmem:[#allocation9 + $0x24] sm:$0xf]
    %v375 = vld [vmem:[#allocation9 + $0x28] sm:$0xf]
    %v376 = vld [vmem:[#allocation9 + $0x2c] sm:$0xf]
    %v377 = vld [vmem:[#allocation9 + $0x30] sm:$0xf]
    %v378 = vld [vmem:[#allocation9 + $0x34] sm:$0xf]
    %v379 = vld [vmem:[#allocation9 + $0x38] sm:$0xf]
    %v380 = vld [vmem:[#allocation9 + $0x3c] sm:$0xf]
    %v381 = vunpack.c.l.bf16 %v365
    %v382 = vunpack.c.l.bf16 %v366
    %v383 = vunpack.c.l.bf16 %v367
    %v384 = vunpack.c.l.bf16 %v368
    %v385 = vunpack.c.l.bf16 %v369
    %v386 = vunpack.c.l.bf16 %v370
    %v387 = vunpack.c.l.bf16 %v371
    %v388 = vunpack.c.l.bf16 %v372
    %v389 = vunpack.c.l.bf16 %v373
    %v390 = vunpack.c.l.bf16 %v374
    %v391 = vunpack.c.l.bf16 %v375
    %v392 = vunpack.c.l.bf16 %v376
    %v393 = vunpack.c.l.bf16 %v377
    %v394 = vunpack.c.l.bf16 %v378
    %v395 = vunpack.c.l.bf16 %v379
    %v396 = vunpack.c.l.bf16 %v380
    %v397 = vmul.f32 %v317, %v381
    %v398 = vmul.f32 %v318, %v382
    %v399 = vmul.f32 %v319, %v383
    %v400 = vmul.f32 %v320, %v384
    %v401 = vmul.f32 %v321, %v385
    %v402 = vmul.f32 %v322, %v386
    %v403 = vmul.f32 %v323, %v387
    %v404 = vmul.f32 %v324, %v388
    %v405 = vmul.f32 %v325, %v389
    %v406 = vmul.f32 %v326, %v390
    %v407 = vmul.f32 %v327, %v391
    %v408 = vmul.f32 %v328, %v392
    %v409 = vmul.f32 %v329, %v393
    %v410 = vmul.f32 %v330, %v394
    %v411 = vmul.f32 %v331, %v395
    %v412 = vmul.f32 %v332, %v396
    %v413 = vadd.f32 %v349, %v397
    %v414 = vadd.f32 %v350, %v398
    %v415 = vadd.f32 %v351, %v399
    %v416 = vadd.f32 %v352, %v400
    %v417 = vadd.f32 %v353, %v401
    %v418 = vadd.f32 %v354, %v402
    %v419 = vadd.f32 %v355, %v403
    %v420 = vadd.f32 %v356, %v404
    %v421 = vadd.f32 %v357, %v405
    %v422 = vadd.f32 %v358, %v406
    %v423 = vadd.f32 %v359, %v407
    %v424 = vadd.f32 %v360, %v408
    %v425 = vadd.f32 %v361, %v409
    %v426 = vadd.f32 %v362, %v410
    %v427 = vadd.f32 %v363, %v411
    %v428 = vadd.f32 %v364, %v412
    %v429 = vld [vmem:[#allocation2] sm:$0xff]
    %v430 = vld [vmem:[#allocation3] sm:$0xff]
    %v431 = vpack.c.bf16 %v430, %v430
    %v432 = vpack.c.bf16 %v414, %v413
    %v433 = vpack.c.bf16 %v416, %v415
    %v434 = vpack.c.bf16 %v418, %v417
    %v435 = vpack.c.bf16 %v420, %v419
    %v436 = vpack.c.bf16 %v422, %v421
    %v437 = vpack.c.bf16 %v424, %v423
    %v438 = vpack.c.bf16 %v426, %v425
    %v439 = vpack.c.bf16 %v428, %v427
    %440 = vmatprep.subr.bf16.mxu0 0
    %441 = vmatpush1.bf16.xpose.msra.mxu0 %v432
    %442 = vmatprep.subr.bf16.mxu0 0
    %443 = vmatpush1.bf16.xpose.msra.mxu0 %v433
    %444 = vmatprep.subr.bf16.mxu0 0
    %445 = vmatpush1.bf16.xpose.msra.mxu0 %v434
    %446 = vmatprep.subr.bf16.mxu0 0
    %447 = vmatpush1.bf16.xpose.msra.mxu0 %v435
    %448 = vmatprep.subr.bf16.mxu0 0
    %449 = vmatpush1.bf16.xpose.msra.mxu0 %v436
    %450 = vmatprep.subr.bf16.mxu0 0
    %451 = vmatpush1.bf16.xpose.msra.mxu0 %v437
    %452 = vmatprep.subr.bf16.mxu0 0
    %453 = vmatpush1.bf16.xpose.msra.mxu0 %v438
    %454 = vmatprep.subr.bf16.mxu0 0
    %455 = vmatpush1.bf16.xpose.msra.mxu0 %v439
    %456 = vmatprep.subr.bf16.mxu0 0
    %457 = vmatpush1.bf16.xpose.msra.mxu0 0
    %458 = vmatprep.subr.bf16.mxu0 0
    %459 = vmatpush1.bf16.xpose.msra.mxu0 0
    %460 = vmatprep.subr.bf16.mxu0 0
    %461 = vmatpush1.bf16.xpose.msra.mxu0 0
    %462 = vmatprep.subr.bf16.mxu0 0
    %463 = vmatpush1.bf16.xpose.msra.mxu0 0
    %464 = vmatprep.subr.bf16.mxu0 0
    %465 = vmatpush1.bf16.xpose.msra.mxu0 0
    %466 = vmatprep.subr.bf16.mxu0 0
    %467 = vmatpush1.bf16.xpose.msra.mxu0 0
    %468 = vmatprep.subr.bf16.mxu0 0
    %469 = vmatpush1.bf16.xpose.msra.mxu0 0
    %470 = vmatprep.subr.bf16.mxu0 0
    %471 = vmatpush1.bf16.xpose.msra.mxu0 0
    %472 = vmatprep.mubr.bf16.mxu0 0
    %473 = vmatmul.mubr.bf16.gmra.mrb[0].mxu0 %v431
    %v474 = vpop.f32.mrb[0].mxu0
    %v475 = vadd.f32 0.0, %v474
    %v476 = vpop.f32.mrb[0].mxu0
    %v477 = vpop.f32.mrb[0].mxu0
    %v478 = vpop.f32.mrb[0].mxu0
    %479 = vdwg.mxu0
    %v480 = vadd.f32 %v429, %v475
    %481 = vst [vmem:[#allocation2] sm:$0xff] %v480
    // Predicated region
    $region38: #{tpu_custom_call.1} parent=1 // pred_check
      %p482 = pneg %p72
    $region39: #{tpu_custom_call.1} parent=1 // pred_check_branch
      %484 = sbr.rel (%p482) target = $region41
    $region40: #{tpu_custom_call.1} parent=1 // pred_region
      %v485 = vld [vmem:[#allocation2] sm:$0xff]
      %486 = vst [vmem:[#allocation11] sm:$0xff] %v485
    $region41: #{tpu_custom_call.1} parent=1 // pred_fallthru
      _
    // Predicated region
    $region42: #{tpu_custom_call.1} parent=1 // pred_check
      _
    $region43: #{tpu_custom_call.1} parent=1 // pred_check_branch
      %488 = sbr.rel (0) target = $region45
    $region44: #{tpu_custom_call.1} parent=1 // pred_region
      %s490 = ssub.s32 128, 128
      %491 = vsyncadd [#allocation5], %s490
      %s493 = sshll.u32 [#allocation11], 4
      %s494 = int_to_ptr.vmem [resolvable:$true] %s493
      %496 = dma.vmem_to_hbm [thread:$0]  %s494, 128, %s4, [#allocation5]
    $region45: #{tpu_custom_call.1} parent=1 // pred_fallthru
      _
    // Predicated region
    $region46: #{tpu_custom_call.1} parent=1 // pred_check
      _
    $region47: #{tpu_custom_call.1} parent=1 // pred_check_branch
      %498 = sbr.rel (0) target = $region49
    $region48: #{tpu_custom_call.1} parent=1 // pred_region
      %499 = dma.done [#allocation5], 128
    $region49: #{tpu_custom_call.1} parent=1 // pred_fallthru
      _
    %500 = vsyncpa [#allocation4], 1
    %501 = vsyncpa [#allocation7], 1
    %502 = vsyncpa [#allocation10], 1
    %503 = vsyncpa [#allocation5], 1

</llo_original>
